<compile_context>
chip_gen: v7x
topology: tpu7x:2x2x1
jax: 0.10.0
libtpu: 0.0.40
codegen_flags: <defaults>
</compile_context>

<pallas_src>
import functools
import math

import jax
import jax.numpy as jnp
from jax.experimental import pallas as pl
from jax.experimental.pallas import tpu as pltpu


def _group_rnn_seq_kernel(n_modules, hidden_size,
                          x_ref,      # (1, B, mod_in)        f32  per-step block
                          h0_ref,     # (B, H)                f32  resident
                          wih_ref,    # (mod_in + H, N*H)     bf16 resident (=[Wi;Wh])
                          bih_ref,    # (1, N*H)              f32  resident (=bi+bh)
                          wr1_ref,    # (mod_in, H)           bf16 resident
                          br1_ref,    # (1, H)                f32  resident
                          wr2_ref,    # (H, N)                bf16 resident
                          br2_ref,    # (1, N)                f32  resident
                          exp_ref,    # (N, N*H)              f32  resident 0/1 expansion
                          out_ref,    # (T, B, H)             f32  resident output block
                          h_carry):   # VMEM scratch (B, H)   f32  hidden-state carry
    t = pl.program_id(0)

    @pl.when(t == 0)
    def _init():
        h_carry[...] = h0_ref[...]

    x = x_ref[0]                  # (B, mod_in) f32
    h_prev = h_carry[...]         # (B, H)      f32

    # ---- h_new = tanh(i2h(x) + h2h(h)), fused into a single MXU matmul -----
    xh = jnp.concatenate([x, h_prev], axis=-1).astype(jnp.bfloat16)   # (B, mod_in+H)
    z = jnp.dot(xh, wih_ref[...], preferred_element_type=jnp.float32) + bih_ref[...]
    z = jnp.tanh(z)                                                    # (B, N*H) f32

    # ---- module_router(x): Linear -> ReLU -> Linear -> Softmax(dim=0) ------
    xb = x.astype(jnp.bfloat16)
    r = jnp.dot(xb, wr1_ref[...], preferred_element_type=jnp.float32) + br1_ref[...]
    r = jnp.maximum(r, 0.0).astype(jnp.bfloat16)
    logits = jnp.dot(r, wr2_ref[...], preferred_element_type=jnp.float32) + br2_ref[...]
    # nn.Softmax(dim=0): normalization over the BATCH dimension.
    m = jnp.max(logits, axis=0, keepdims=True)
    e = jnp.exp(logits - m)
    w = e / jnp.sum(e, axis=0, keepdims=True)          # (B, N) f32

    # ---- einsum('bnh,bn->bh') -----------------------------------------------
    # Expand w -> (B, N*H) with one tiny exact 0/1 matmul (rides the idle MXU,
    # no per-module broadcast_in_dim), one VPU multiply, static group-sum.
    w_rep = jnp.dot(w, exp_ref[...], preferred_element_type=jnp.float32)  # (B, N*H)
    wz = z * w_rep
    out = wz[:, 0:hidden_size]
    for n in range(1, n_modules):
        out = out + wz[:, n * hidden_size:(n + 1) * hidden_size]

    h_carry[...] = out
    out_ref[t] = out.astype(out_ref.dtype)


def group_rnn_sequence(x_seq, h0, params, *, n_modules, hidden_size):
    """Run GroupRNNCell over a sequence in one pallas_call.

    x_seq: (T, B, mod_in) f32, h0: (B, hidden) f32.
    Returns (T, B, hidden) f32 — the cell output (= next hidden state) per step.
    """
    T, B, mod_in = x_seq.shape
    wih, bih, wr1, br1, wr2, br2 = params
    NH = n_modules * hidden_size
    assert wih.shape == (mod_in + hidden_size, NH)

    # 0/1 group-expansion matrix: expand[n, k] = 1 iff k // hidden_size == n.
    expand = jnp.repeat(jnp.eye(n_modules, dtype=jnp.float32), hidden_size, axis=1)

    def resident(nd):
        return lambda t: (0,) * nd

    in_specs = [
        pl.BlockSpec((1, B, mod_in), lambda t: (t, 0, 0)),    # x_t, streamed per step
        pl.BlockSpec((B, hidden_size), resident(2)),          # h0 (read only at t==0)
        pl.BlockSpec(wih.shape, resident(2)),                 # fused [Wi;Wh]  (bf16)
        pl.BlockSpec(bih.shape, resident(2)),                 # bi + bh
        pl.BlockSpec(wr1.shape, resident(2)),
        pl.BlockSpec(br1.shape, resident(2)),
        pl.BlockSpec(wr2.shape, resident(2)),
        pl.BlockSpec(br2.shape, resident(2)),
        pl.BlockSpec(expand.shape, resident(2)),
    ]

    kernel = functools.partial(_group_rnn_seq_kernel, n_modules, hidden_size)
    return pl.pallas_call(
        kernel,
        grid=(T,),
        in_specs=in_specs,
        # Whole output resident as one block -> single contiguous HBM writeback.
        out_specs=pl.BlockSpec((T, B, hidden_size), lambda t: (0, 0, 0)),
        out_shape=jax.ShapeDtypeStruct((T, B, hidden_size), jnp.float32),
        scratch_shapes=[pltpu.VMEM((B, hidden_size), jnp.float32)],
        compiler_params=pltpu.CompilerParams(
            # Time axis carries the recurrence -> must be "arbitrary".  The
            # batch axis is NOT a grid axis (softmax over batch forbids tiling it).
            dimension_semantics=("arbitrary",)),
    )(x_seq, h0, wih, bih, wr1, br1, wr2, br2, expand)


def group_rnn_cell(x, h, params, *, n_modules, hidden_size):
    """Single-step call matching the original module's forward(x, h, op=None)."""
    return group_rnn_sequence(x[None], h, params,
                              n_modules=n_modules, hidden_size=hidden_size)[0]


def _init_linear(key, in_f, out_f):
    # PyTorch-style uniform init U[-1/sqrt(fan_in), 1/sqrt(fan_in)];
    # weight stored transposed as (in_f, out_f), bias as (1, out_f).
    kw, kb = jax.random.split(key)
    bound = 1.0 / math.sqrt(in_f)
    w = jax.random.uniform(kw, (in_f, out_f), jnp.float32, -bound, bound)
    b = jax.random.uniform(kb, (1, out_f), jnp.float32, -bound, bound)
    return w, b


def _ref_step_f32(x, h, fparams, *, n_modules, hidden_size):
    # Pure-f32 reference mirroring the PyTorch forward (op=None path).
    wi, bi, wh, bh, wr1, br1, wr2, br2 = fparams
    z = jnp.tanh(x @ wi + bi + h @ wh + bh)
    z = z.reshape(x.shape[0], n_modules, hidden_size)
    r = jnp.maximum(x @ wr1 + br1, 0.0)
    logits = r @ wr2 + br2
    w = jax.nn.softmax(logits, axis=0)
    return jnp.einsum('bnh,bn->bh', z, w)


def _ref_step_bf16(x, h, kparams, *, n_modules, hidden_size):
    # Same math as the kernel: bf16 matmul operands, f32 accumulation.
    wih, bih, wr1, br1, wr2, br2 = kparams
    xh = jnp.concatenate([x, h], axis=-1).astype(jnp.bfloat16)
    z = jnp.tanh(jnp.dot(xh, wih, preferred_element_type=jnp.float32) + bih)
    z = z.reshape(x.shape[0], n_modules, hidden_size)
    r = jnp.dot(x.astype(jnp.bfloat16), wr1, preferred_element_type=jnp.float32) + br1
    r = jnp.maximum(r, 0.0).astype(jnp.bfloat16)
    logits = jnp.dot(r, wr2, preferred_element_type=jnp.float32) + br2
    w = jax.nn.softmax(logits, axis=0)
    return jnp.einsum('bnh,bn->bh', z, w)


if __name__ == "__main__":
    batch = 2
    mod_in_size = 16
    router_in_size = 16       # op=None path: router consumes x
    hidden_size = 32
    n_modules = 4
    seq_len = 8

    key = jax.random.PRNGKey(0)
    kx, kh, k_i2h, k_h2h, k_r1, k_r2 = jax.random.split(key, 6)

    x_seq = jax.random.normal(kx, (seq_len, batch, mod_in_size), jnp.float32)
    h0 = jax.random.normal(kh, (batch, hidden_size), jnp.float32)

    wi, bi = _init_linear(k_i2h, mod_in_size, hidden_size * n_modules)
    wh, bh = _init_linear(k_h2h, hidden_size, hidden_size * n_modules)
    wr1, br1 = _init_linear(k_r1, router_in_size, hidden_size)
    wr2, br2 = _init_linear(k_r2, hidden_size, n_modules)

    fparams = (wi, bi, wh, bh, wr1, br1, wr2, br2)          # f32 reference params
    kparams = (jnp.concatenate([wi, wh], axis=0).astype(jnp.bfloat16),  # fused [Wi;Wh]
               bi + bh,                                                  # fused bias
               wr1.astype(jnp.bfloat16), br1,
               wr2.astype(jnp.bfloat16), br2)

    out = group_rnn_sequence(x_seq, h0, kparams,
                             n_modules=n_modules, hidden_size=hidden_size)
    out = jax.block_until_ready(out)
    assert out.shape == (seq_len, batch, hidden_size)

    # Check 1: full recurrence vs. a reference using the same bf16 matmul math.
    h = h0
    ref_steps = []
    for t in range(seq_len):
        h = _ref_step_bf16(x_seq[t], h, kparams,
                           n_modules=n_modules, hidden_size=hidden_size)
        ref_steps.append(h)
    ref_bf16 = jnp.stack(ref_steps, axis=0)
    err = jnp.max(jnp.abs(out - ref_bf16))
    assert jnp.allclose(out, ref_bf16, atol=5e-3, rtol=5e-3), f"max abs err {err}"

    # Check 2 (semantics): first step vs. the pure-f32 PyTorch-style forward
    # (looser tolerance because kernel matmul operands are bf16).
    ref0 = _ref_step_f32(x_seq[0], h0, fparams,
                         n_modules=n_modules, hidden_size=hidden_size)
    err0 = jnp.max(jnp.abs(out[0] - ref0))
    assert jnp.allclose(out[0], ref0, atol=5e-2, rtol=5e-2), f"step0 abs err {err0}"

    print("KERNEL_OK")
</pallas_src>

<mosaic_0001>
module attributes {stable_mosaic.version = 11 : i64} {
  func.func @_group_rnn_seq_kernel(%arg0: i32, %arg1: memref<1x2x16xf32, #tpu.memory_space<vmem>>, %arg2: memref<2x32xf32, #tpu.memory_space<vmem>>, %arg3: memref<48x128xbf16, #tpu.memory_space<vmem>>, %arg4: memref<1x128xf32, #tpu.memory_space<vmem>>, %arg5: memref<16x32xbf16, #tpu.memory_space<vmem>>, %arg6: memref<1x32xf32, #tpu.memory_space<vmem>>, %arg7: memref<32x4xbf16, #tpu.memory_space<vmem>>, %arg8: memref<1x4xf32, #tpu.memory_space<vmem>>, %arg9: memref<4x128xf32, #tpu.memory_space<vmem>>, %arg10: memref<8x2x32xf32, #tpu.memory_space<vmem>>, %arg11: memref<2x32xf32, #tpu.memory_space<vmem>>) attributes {dimension_semantics = [#tpu.dimension_semantics<arbitrary>], iteration_bounds = array<i64: 8>, scalar_prefetch = 0 : i64, scratch_operands = 1 : i64, tpu.core_type = #tpu.core_type<tc>, window_params = [{transform_indices = @transform_0, window_bounds = array<i64: 1, 2, 16>}, {pipeline_mode = #tpu.pipeline_mode<synchronous>, transform_indices = @transform_1, window_bounds = array<i64: 2, 32>}, {pipeline_mode = #tpu.pipeline_mode<synchronous>, transform_indices = @transform_2, window_bounds = array<i64: 48, 128>}, {pipeline_mode = #tpu.pipeline_mode<synchronous>, transform_indices = @transform_3, window_bounds = array<i64: 1, 128>}, {pipeline_mode = #tpu.pipeline_mode<synchronous>, transform_indices = @transform_4, window_bounds = array<i64: 16, 32>}, {pipeline_mode = #tpu.pipeline_mode<synchronous>, transform_indices = @transform_5, window_bounds = array<i64: 1, 32>}, {pipeline_mode = #tpu.pipeline_mode<synchronous>, transform_indices = @transform_6, window_bounds = array<i64: 32, 4>}, {pipeline_mode = #tpu.pipeline_mode<synchronous>, transform_indices = @transform_7, window_bounds = array<i64: 1, 4>}, {pipeline_mode = #tpu.pipeline_mode<synchronous>, transform_indices = @transform_8, window_bounds = array<i64: 4, 128>}, {pipeline_mode = #tpu.pipeline_mode<synchronous>, transform_indices = @transform_9, window_bounds = array<i64: 8, 2, 32>}]} {
    %c0_i32 = arith.constant 0 : i32
    %0 = arith.cmpi eq, %arg0, %c0_i32 : i32
    %1 = arith.extui %0 : i1 to i32
    %c0_i32_0 = arith.constant 0 : i32
    %2 = arith.cmpi ne, %1, %c0_i32_0 : i32
    scf.if %2 {
      %c0_29 = arith.constant 0 : index
      %c0_30 = arith.constant 0 : index
      %52 = vector.load %arg2[%c0_29, %c0_30] : memref<2x32xf32, #tpu.memory_space<vmem>>, vector<2x32xf32>
      %c0_31 = arith.constant 0 : index
      %c0_32 = arith.constant 0 : index
      %53 = vector.load %arg11[%c0_31, %c0_32] : memref<2x32xf32, #tpu.memory_space<vmem>>, vector<2x32xf32>
      tpu.vector_store %arg11[%c0_31, %c0_32], %52 {strides = array<i32>} : memref<2x32xf32, #tpu.memory_space<vmem>>, vector<2x32xf32>,
    } else {
    }
    %c0 = arith.constant 0 : index
    %c0_1 = arith.constant 0 : index
    %c0_2 = arith.constant 0 : index
    %3 = vector.load %arg1[%c0, %c0_1, %c0_2] : memref<1x2x16xf32, #tpu.memory_space<vmem>>, vector<1x2x16xf32>
    %4 = vector.shape_cast %3 : vector<1x2x16xf32> to vector<2x16xf32>
    %c0_3 = arith.constant 0 : index
    %c0_4 = arith.constant 0 : index
    %5 = vector.load %arg11[%c0_3, %c0_4] : memref<2x32xf32, #tpu.memory_space<vmem>>, vector<2x32xf32>
    %6 = tpu.concatenate %4, %5 in 1 : vector<2x16xf32>, vector<2x32xf32> -> vector<2x48xf32>
    %7 = arith.truncf %6 : vector<2x48xf32> to vector<2x48xbf16>
    %c0_5 = arith.constant 0 : index
    %c0_6 = arith.constant 0 : index
    %8 = vector.load %arg3[%c0_5, %c0_6] : memref<48x128xbf16, #tpu.memory_space<vmem>>, vector<48x128xbf16>
    %cst = arith.constant dense<0.000000e+00> : vector<2x128xf32>
    %9 = tpu.matmul %7, %8, %cst {dimension_numbers = #tpu.dot_dimension_numbers<[1], [0], [0], [1], [0, 0, 1, 1], [], []>} : vector<2x48xbf16>, vector<48x128xbf16>, vector<2x128xf32> -> vector<2x128xf32>
    %c0_7 = arith.constant 0 : index
    %c0_8 = arith.constant 0 : index
    %10 = vector.load %arg4[%c0_7, %c0_8] : memref<1x128xf32, #tpu.memory_space<vmem>>, vector<1x128xf32>
    %11 = vector.broadcast %10 : vector<1x128xf32> to vector<2x128xf32>
    %12 = arith.addf %9, %11 : vector<2x128xf32>
    %13 = math.tanh %12 : vector<2x128xf32>
    %14 = arith.truncf %4 : vector<2x16xf32> to vector<2x16xbf16>
    %c0_9 = arith.constant 0 : index
    %c0_10 = arith.constant 0 : index
    %15 = vector.load %arg5[%c0_9, %c0_10] : memref<16x32xbf16, #tpu.memory_space<vmem>>, vector<16x32xbf16>
    %cst_11 = arith.constant dense<0.000000e+00> : vector<2x32xf32>
    %16 = tpu.matmul %14, %15, %cst_11 {dimension_numbers = #tpu.dot_dimension_numbers<[1], [0], [0], [1], [0, 0, 1, 1], [], []>} : vector<2x16xbf16>, vector<16x32xbf16>, vector<2x32xf32> -> vector<2x32xf32>
    %c0_12 = arith.constant 0 : index
    %c0_13 = arith.constant 0 : index
    %17 = vector.load %arg6[%c0_12, %c0_13] : memref<1x32xf32, #tpu.memory_space<vmem>>, vector<1x32xf32>
    %18 = vector.broadcast %17 : vector<1x32xf32> to vector<2x32xf32>
    %19 = arith.addf %16, %18 : vector<2x32xf32>
    %cst_14 = arith.constant 0.000000e+00 : f32
    %20 = vector.broadcast %cst_14 : f32 to vector<2x32xf32>
    %21 = arith.maximumf %19, %20 : vector<2x32xf32>
    %22 = arith.truncf %21 : vector<2x32xf32> to vector<2x32xbf16>
    %c0_15 = arith.constant 0 : index
    %c0_16 = arith.constant 0 : index
    %23 = vector.load %arg7[%c0_15, %c0_16] : memref<32x4xbf16, #tpu.memory_space<vmem>>, vector<32x4xbf16>
    %cst_17 = arith.constant dense<0.000000e+00> : vector<2x4xf32>
    %24 = tpu.matmul %22, %23, %cst_17 {dimension_numbers = #tpu.dot_dimension_numbers<[1], [0], [0], [1], [0, 0, 1, 1], [], []>} : vector<2x32xbf16>, vector<32x4xbf16>, vector<2x4xf32> -> vector<2x4xf32>
    %c0_18 = arith.constant 0 : index
    %c0_19 = arith.constant 0 : index
    %25 = vector.load %arg8[%c0_18, %c0_19] : memref<1x4xf32, #tpu.memory_space<vmem>>, vector<1x4xf32>
    %26 = vector.broadcast %25 : vector<1x4xf32> to vector<2x4xf32>
    %27 = arith.addf %24, %26 : vector<2x4xf32>
    %cst_20 = arith.constant dense<0xFF800000> : vector<4xf32>
    %28 = vector.multi_reduction <maximumf>, %27, %cst_20 [0] : vector<2x4xf32> to vector<4xf32>
    %29 = vector.shape_cast %28 : vector<4xf32> to vector<1x4xf32>
    %30 = vector.broadcast %29 : vector<1x4xf32> to vector<2x4xf32>
    %31 = arith.subf %27, %30 : vector<2x4xf32>
    %32 = math.exp %31 : vector<2x4xf32>
    %cst_21 = arith.constant dense<0.000000e+00> : vector<4xf32>
    %33 = vector.multi_reduction <add>, %32, %cst_21 [0] : vector<2x4xf32> to vector<4xf32>
    %34 = vector.shape_cast %33 : vector<4xf32> to vector<1x4xf32>
    %35 = vector.broadcast %34 : vector<1x4xf32> to vector<2x4xf32>
    %36 = arith.divf %32, %35 : vector<2x4xf32>
    %c0_22 = arith.constant 0 : index
    %c0_23 = arith.constant 0 : index
    %37 = vector.load %arg9[%c0_22, %c0_23] : memref<4x128xf32, #tpu.memory_space<vmem>>, vector<4x128xf32>
    %cst_24 = arith.constant dense<0.000000e+00> : vector<2x128xf32>
    %38 = tpu.matmul %36, %37, %cst_24 {dimension_numbers = #tpu.dot_dimension_numbers<[1], [0], [0], [1], [0, 0, 1, 1], [], []>} : vector<2x4xf32>, vector<4x128xf32>, vector<2x128xf32> -> vector<2x128xf32>
    %39 = arith.mulf %13, %38 : vector<2x128xf32>
    %40 = vector.extract_strided_slice %39 {offsets = [0, 0], sizes = [2, 32], strides = [1, 1]} : vector<2x128xf32> to vector<2x32xf32>
    %41 = vector.extract_strided_slice %39 {offsets = [0, 32], sizes = [2, 32], strides = [1, 1]} : vector<2x128xf32> to vector<2x32xf32>
    %42 = arith.addf %40, %41 : vector<2x32xf32>
    %43 = vector.extract_strided_slice %39 {offsets = [0, 64], sizes = [2, 32], strides = [1, 1]} : vector<2x128xf32> to vector<2x32xf32>
    %44 = arith.addf %42, %43 : vector<2x32xf32>
    %45 = vector.extract_strided_slice %39 {offsets = [0, 96], sizes = [2, 32], strides = [1, 1]} : vector<2x128xf32> to vector<2x32xf32>
    %46 = arith.addf %44, %45 : vector<2x32xf32>
    %c0_25 = arith.constant 0 : index
    %c0_26 = arith.constant 0 : index
    %47 = vector.load %arg11[%c0_25, %c0_26] : memref<2x32xf32, #tpu.memory_space<vmem>>, vector<2x32xf32>
    tpu.vector_store %arg11[%c0_25, %c0_26], %46 {strides = array<i32>} : memref<2x32xf32, #tpu.memory_space<vmem>>, vector<2x32xf32>,
    %48 = arith.index_cast %arg0 : i32 to index
    %c0_27 = arith.constant 0 : index
    %c0_28 = arith.constant 0 : index
    %49 = vector.load %arg10[%48, %c0_27, %c0_28] : memref<8x2x32xf32, #tpu.memory_space<vmem>>, vector<1x2x32xf32>
    %50 = vector.shape_cast %49 : vector<1x2x32xf32> to vector<2x32xf32>
    %51 = vector.shape_cast %46 : vector<2x32xf32> to vector<1x2x32xf32>
    tpu.vector_store %arg10[%48, %c0_27, %c0_28], %51 {strides = array<i32>} : memref<8x2x32xf32, #tpu.memory_space<vmem>>, vector<1x2x32xf32>,
    return
  }
  func.func @transform_0(%arg0: i32) -> (i32, i32, i32) {
    %c0_i32 = arith.constant 0 : i32
    %c0_i32_0 = arith.constant 0 : i32
    %c0_i32_1 = arith.constant 0 : i32
    return %arg0, %c0_i32, %c0_i32_0 : i32, i32, i32
  }
  func.func @transform_1(%arg0: i32) -> (i32, i32) {
    %c0_i32 = arith.constant 0 : i32
    %c0_i32_0 = arith.constant 0 : i32
    %c0_i32_1 = arith.constant 0 : i32
    return %c0_i32, %c0_i32_0 : i32, i32
  }
  func.func @transform_2(%arg0: i32) -> (i32, i32) {
    %c0_i32 = arith.constant 0 : i32
    %c0_i32_0 = arith.constant 0 : i32
    %c0_i32_1 = arith.constant 0 : i32
    return %c0_i32, %c0_i32_0 : i32, i32
  }
  func.func @transform_3(%arg0: i32) -> (i32, i32) {
    %c0_i32 = arith.constant 0 : i32
    %c0_i32_0 = arith.constant 0 : i32
    %c0_i32_1 = arith.constant 0 : i32
    return %c0_i32, %c0_i32_0 : i32, i32
  }
  func.func @transform_4(%arg0: i32) -> (i32, i32) {
    %c0_i32 = arith.constant 0 : i32
    %c0_i32_0 = arith.constant 0 : i32
    %c0_i32_1 = arith.constant 0 : i32
    return %c0_i32, %c0_i32_0 : i32, i32
  }
  func.func @transform_5(%arg0: i32) -> (i32, i32) {
    %c0_i32 = arith.constant 0 : i32
    %c0_i32_0 = arith.constant 0 : i32
    %c0_i32_1 = arith.constant 0 : i32
    return %c0_i32, %c0_i32_0 : i32, i32
  }
  func.func @transform_6(%arg0: i32) -> (i32, i32) {
    %c0_i32 = arith.constant 0 : i32
    %c0_i32_0 = arith.constant 0 : i32
    %c0_i32_1 = arith.constant 0 : i32
    return %c0_i32, %c0_i32_0 : i32, i32
  }
  func.func @transform_7(%arg0: i32) -> (i32, i32) {
    %c0_i32 = arith.constant 0 : i32
    %c0_i32_0 = arith.constant 0 : i32
    %c0_i32_1 = arith.constant 0 : i32
    return %c0_i32, %c0_i32_0 : i32, i32
  }
  func.func @transform_8(%arg0: i32) -> (i32, i32) {
    %c0_i32 = arith.constant 0 : i32
    %c0_i32_0 = arith.constant 0 : i32
    %c0_i32_1 = arith.constant 0 : i32
    return %c0_i32, %c0_i32_0 : i32, i32
  }
  func.func @transform_9(%arg0: i32) -> (i32, i32, i32) {
    %c0_i32 = arith.constant 0 : i32
    %c0_i32_0 = arith.constant 0 : i32
    %c0_i32_1 = arith.constant 0 : i32
    %c0_i32_2 = arith.constant 0 : i32
    return %c0_i32, %c0_i32_0, %c0_i32_1 : i32, i32, i32
  }
}

</mosaic_0001>

<llo_original>
// kernel: tpu_custom_call.1
$region0: #{tpu_custom_call.1}
  #allocation0 [shape = 'u32[]', space=smem, size = 0x4, offset = 0x4, fixed_abs, tag = 'smem constant byte address 0x4 - core index']
  #allocation1 [shape = 'u32[144,128]{1,0:T(1,128)}', space=vmem, size = 0x12000, scoped, tag = 'internal scratch']
  #allocation2 [shape = 'f32[2,32]{1,0:T(2,128)}', space=vmem, size = 0x400, scoped, tag = 'scratch operand']
  %s0 = inlined_call_operand.hbm [shape: f32[8,2,16], index: 0, kind: input, shape index: {}]
  %s1 = inlined_call_operand.hbm [shape: f32[2,32], index: 1, kind: input, shape index: {}]
  %s2 = inlined_call_operand.vmem [shape: bf16[48,128], index: 2, kind: input, shape index: {}]
  %s3 = inlined_call_operand.hbm [shape: f32[1,128], index: 3, kind: input, shape index: {}]
  %s4 = inlined_call_operand.vmem [shape: bf16[16,32], index: 4, kind: input, shape index: {}]
  %s5 = inlined_call_operand.hbm [shape: f32[1,32], index: 5, kind: input, shape index: {}]
  %s6 = inlined_call_operand.vmem [shape: bf16[32,4], index: 6, kind: input, shape index: {}]
  %s7 = inlined_call_operand.vmem [shape: f32[1,4], index: 7, kind: input, shape index: {}]
  %s8 = inlined_call_operand.vmem [shape: f32[4,128], index: 8, kind: input, shape index: {}]
  %s9 = inlined_call_operand.hbm [shape: f32[8,2,32], index: 9, kind: output, shape index: {}]
  %s10 = sld [smem:[#allocation0]]
  $region89: #{tpu_custom_call.1} parent=0
    _
  %s12 = ssub.s32 1, %s10
  %s13 = scalar_select 0, %s12, %s10
  $region1: #{tpu_custom_call.1} parent=0
    #allocation3 [shape = 'u8[2048]{0}', space=vmem, size = 0x800, scoped, tag = 'input window, operand 0']
    #allocation4 [shape = 's32[2]{0}', space=sflag, size = 0x8, scoped, tag = 'scoped memory for tpu_custom_call.1']
    #allocation5 [shape = 's32[2]{0}', space=sflag, size = 0x8, scoped, tag = 'scoped memory for tpu_custom_call.1']
    #allocation6 [shape = 'u8[1024]{0}', space=vmem, size = 0x400, scoped, tag = 'input window, operand 1, single buffered']
    #allocation7 [shape = 's32[1]{0}', space=sflag, size = 0x4, scoped, tag = 'scoped memory for tpu_custom_call.1']
    #allocation8 [shape = 'u8[512]{0}', space=vmem, size = 0x400, scoped, tag = 'input window, operand 3, single buffered']
    #allocation9 [shape = 'u8[512]{0}', space=vmem, size = 0x400, scoped, tag = 'input window, operand 5, single buffered']
    #allocation10 [shape = 's32[1]{0}', space=sflag, size = 0x4, scoped, tag = 'scoped memory for tpu_custom_call.1']
    #allocation11 [shape = 'u8[8192]{0}', space=vmem, size = 0x2000, scoped, tag = 'output window, operand 0, single buffered']
    %14 = vsyncpa [#allocation4], 0
    %s15 = scalar_lea.sflag [#allocation4], 1
    %16 = vsyncpa %s15, 0
    %17 = vsyncpa [#allocation7], 0
    %18 = vsyncpa [#allocation10], 0
    %19 = vsyncpa [#allocation5], 0
    loop: start=0, step=1, limit=10
    $region2: #{tpu_custom_call.1} parent=1 // loop_pre_header
      _
    $region3: #{tpu_custom_call.1} parent=1 // loop_header
      %s21 = sphi 0, %s25
      %p22 = scmp.ge.s32.totalorder %s21, 10
      %s31 = sphi 0, %s33
      %s34 = sphi 0, %s31
      %s35 = sphi 0, %s34
      %s51 = sphi 0, %s35
      %s55 = sphi 0, %s55
      %s57 = sphi 0, %s55
      %s58 = sphi 0, %s57
      %s72 = sphi 0, %s58
      %s76 = sphi 0, %s76
      %s78 = sphi 0, %s76
      %s79 = sphi 0, %s78
      %s93 = sphi 0, %s79
      %s97 = sphi 0, %s97
      %s99 = sphi 0, %s97
      %s100 = sphi 0, %s99
      %s114 = sphi 0, %s100
      %s118 = sphi 0, %s118
      %s120 = sphi 0, %s118
      %s121 = sphi 0, %s120
      %s135 = sphi 0, %s121
      %s139 = sphi 0, %s139
      %s141 = sphi 0, %s139
      %s142 = sphi 0, %s141
      %s156 = sphi 0, %s142
      %s160 = sphi 0, %s160
      %s162 = sphi 0, %s160
      %s163 = sphi 0, %s162
      %s177 = sphi 0, %s163
      %s181 = sphi 0, %s181
      %s183 = sphi 0, %s181
      %s184 = sphi 0, %s183
      %s198 = sphi 0, %s184
      %s202 = sphi 0, %s202
      %s204 = sphi 0, %s202
      %s205 = sphi 0, %s204
      %s219 = sphi 0, %s205
      %s223 = sphi 0, %s223
      %s225 = sphi 0, %s223
      %s226 = sphi 0, %s225
      %s240 = sphi 0, %s226
    $region4: #{tpu_custom_call.1} parent=1 // loop_header_branch
      %24 = sbr.rel (%p22) target = $region8
    $region5: #{tpu_custom_call.1} parent=1 // loop_body
      %s26 = ssub.s32 %s21, 1
      %s27 = ssub.s32 %s21, 2
      %s28 = sadd.s32 %s21, 1
      %s29 = ssub.s32 %s21, %s28
      %p30 = scmp.eq.s32.totalorder %s29, 0
      %s32 = sadd.s32 %s31, 1
      %s33 = scalar_select %p30, %s31, %s32
      %p36 = pneg %p30
      %p37 = scmp.eq.s32.totalorder %s21, 7
      %p38 = por %p36, %p37
      %p39 = scmp.ne.s32.totalorder %s31, %s34
      %p40 = scmp.eq.s32.totalorder %s21, 0
      %p41 = por %p39, %p40
      %p42 = scmp.ne.s32.totalorder %s31, %s34
      %p43 = scmp.eq.s32.totalorder %s26, 7
      %p44 = por %p42, %p43
      %p45 = scmp.ne.s32.totalorder %s34, %s35
      %p46 = scmp.eq.s32.totalorder %s26, 0
      %p47 = por %p45, %p46
      %p48 = scmp.ne.s32.totalorder %s34, %s35
      %p49 = scmp.eq.s32.totalorder %s27, 7
      %p50 = por %p48, %p49
      %p52 = scmp.ne.s32.totalorder %s35, %s51
      %p53 = scmp.eq.s32.totalorder %s27, 0
      %p54 = por %p52, %p53
      %s56 = sadd.s32 %s55, 1
      %p59 = scmp.eq.s32.totalorder %s21, 7
      %p60 = scmp.ne.s32.totalorder %s55, %s57
      %p61 = scmp.eq.s32.totalorder %s21, 0
      %p62 = por %p60, %p61
      %p63 = scmp.ne.s32.totalorder %s55, %s57
      %p64 = scmp.eq.s32.totalorder %s26, 7
      %p65 = por %p63, %p64
      %p66 = scmp.ne.s32.totalorder %s57, %s58
      %p67 = scmp.eq.s32.totalorder %s26, 0
      %p68 = por %p66, %p67
      %p69 = scmp.ne.s32.totalorder %s57, %s58
      %p70 = scmp.eq.s32.totalorder %s27, 7
      %p71 = por %p69, %p70
      %p73 = scmp.ne.s32.totalorder %s58, %s72
      %p74 = scmp.eq.s32.totalorder %s27, 0
      %p75 = por %p73, %p74
      %s77 = sadd.s32 %s76, 1
      %p80 = scmp.eq.s32.totalorder %s21, 7
      %p81 = scmp.ne.s32.totalorder %s76, %s78
      %p82 = scmp.eq.s32.totalorder %s21, 0
      %p83 = por %p81, %p82
      %p84 = scmp.ne.s32.totalorder %s76, %s78
      %p85 = scmp.eq.s32.totalorder %s26, 7
      %p86 = por %p84, %p85
      %p87 = scmp.ne.s32.totalorder %s78, %s79
      %p88 = scmp.eq.s32.totalorder %s26, 0
      %p89 = por %p87, %p88
      %p90 = scmp.ne.s32.totalorder %s78, %s79
      %p91 = scmp.eq.s32.totalorder %s27, 7
      %p92 = por %p90, %p91
      %p94 = scmp.ne.s32.totalorder %s79, %s93
      %p95 = scmp.eq.s32.totalorder %s27, 0
      %p96 = por %p94, %p95
      %s98 = sadd.s32 %s97, 1
      %p101 = scmp.eq.s32.totalorder %s21, 7
      %p102 = scmp.ne.s32.totalorder %s97, %s99
      %p103 = scmp.eq.s32.totalorder %s21, 0
      %p104 = por %p102, %p103
      %p105 = scmp.ne.s32.totalorder %s97, %s99
      %p106 = scmp.eq.s32.totalorder %s26, 7
      %p107 = por %p105, %p106
      %p108 = scmp.ne.s32.totalorder %s99, %s100
      %p109 = scmp.eq.s32.totalorder %s26, 0
      %p110 = por %p108, %p109
      %p111 = scmp.ne.s32.totalorder %s99, %s100
      %p112 = scmp.eq.s32.totalorder %s27, 7
      %p113 = por %p111, %p112
      %p115 = scmp.ne.s32.totalorder %s100, %s114
      %p116 = scmp.eq.s32.totalorder %s27, 0
      %p117 = por %p115, %p116
      %s119 = sadd.s32 %s118, 1
      %p122 = scmp.eq.s32.totalorder %s21, 7
      %p123 = scmp.ne.s32.totalorder %s118, %s120
      %p124 = scmp.eq.s32.totalorder %s21, 0
      %p125 = por %p123, %p124
      %p126 = scmp.ne.s32.totalorder %s118, %s120
      %p127 = scmp.eq.s32.totalorder %s26, 7
      %p128 = por %p126, %p127
      %p129 = scmp.ne.s32.totalorder %s120, %s121
      %p130 = scmp.eq.s32.totalorder %s26, 0
      %p131 = por %p129, %p130
      %p132 = scmp.ne.s32.totalorder %s120, %s121
      %p133 = scmp.eq.s32.totalorder %s27, 7
      %p134 = por %p132, %p133
      %p136 = scmp.ne.s32.totalorder %s121, %s135
      %p137 = scmp.eq.s32.totalorder %s27, 0
      %p138 = por %p136, %p137
      %s140 = sadd.s32 %s139, 1
      %p143 = scmp.eq.s32.totalorder %s21, 7
      %p144 = scmp.ne.s32.totalorder %s139, %s141
      %p145 = scmp.eq.s32.totalorder %s21, 0
      %p146 = por %p144, %p145
      %p147 = scmp.ne.s32.totalorder %s139, %s141
      %p148 = scmp.eq.s32.totalorder %s26, 7
      %p149 = por %p147, %p148
      %p150 = scmp.ne.s32.totalorder %s141, %s142
      %p151 = scmp.eq.s32.totalorder %s26, 0
      %p152 = por %p150, %p151
      %p153 = scmp.ne.s32.totalorder %s141, %s142
      %p154 = scmp.eq.s32.totalorder %s27, 7
      %p155 = por %p153, %p154
      %p157 = scmp.ne.s32.totalorder %s142, %s156
      %p158 = scmp.eq.s32.totalorder %s27, 0
      %p159 = por %p157, %p158
      %s161 = sadd.s32 %s160, 1
      %p164 = scmp.eq.s32.totalorder %s21, 7
      %p165 = scmp.ne.s32.totalorder %s160, %s162
      %p166 = scmp.eq.s32.totalorder %s21, 0
      %p167 = por %p165, %p166
      %p168 = scmp.ne.s32.totalorder %s160, %s162
      %p169 = scmp.eq.s32.totalorder %s26, 7
      %p170 = por %p168, %p169
      %p171 = scmp.ne.s32.totalorder %s162, %s163
      %p172 = scmp.eq.s32.totalorder %s26, 0
      %p173 = por %p171, %p172
      %p174 = scmp.ne.s32.totalorder %s162, %s163
      %p175 = scmp.eq.s32.totalorder %s27, 7
      %p176 = por %p174, %p175
      %p178 = scmp.ne.s32.totalorder %s163, %s177
      %p179 = scmp.eq.s32.totalorder %s27, 0
      %p180 = por %p178, %p179
      %s182 = sadd.s32 %s181, 1
      %p185 = scmp.eq.s32.totalorder %s21, 7
      %p186 = scmp.ne.s32.totalorder %s181, %s183
      %p187 = scmp.eq.s32.totalorder %s21, 0
      %p188 = por %p186, %p187
      %p189 = scmp.ne.s32.totalorder %s181, %s183
      %p190 = scmp.eq.s32.totalorder %s26, 7
      %p191 = por %p189, %p190
      %p192 = scmp.ne.s32.totalorder %s183, %s184
      %p193 = scmp.eq.s32.totalorder %s26, 0
      %p194 = por %p192, %p193
      %p195 = scmp.ne.s32.totalorder %s183, %s184
      %p196 = scmp.eq.s32.totalorder %s27, 7
      %p197 = por %p195, %p196
      %p199 = scmp.ne.s32.totalorder %s184, %s198
      %p200 = scmp.eq.s32.totalorder %s27, 0
      %p201 = por %p199, %p200
      %s203 = sadd.s32 %s202, 1
      %p206 = scmp.eq.s32.totalorder %s21, 7
      %p207 = scmp.ne.s32.totalorder %s202, %s204
      %p208 = scmp.eq.s32.totalorder %s21, 0
      %p209 = por %p207, %p208
      %p210 = scmp.ne.s32.totalorder %s202, %s204
      %p211 = scmp.eq.s32.totalorder %s26, 7
      %p212 = por %p210, %p211
      %p213 = scmp.ne.s32.totalorder %s204, %s205
      %p214 = scmp.eq.s32.totalorder %s26, 0
      %p215 = por %p213, %p214
      %p216 = scmp.ne.s32.totalorder %s204, %s205
      %p217 = scmp.eq.s32.totalorder %s27, 7
      %p218 = por %p216, %p217
      %p220 = scmp.ne.s32.totalorder %s205, %s219
      %p221 = scmp.eq.s32.totalorder %s27, 0
      %p222 = por %p220, %p221
      %s224 = sadd.s32 %s223, 1
      %p227 = scmp.eq.s32.totalorder %s21, 7
      %p228 = scmp.ne.s32.totalorder %s223, %s225
      %p229 = scmp.eq.s32.totalorder %s21, 0
      %p230 = por %p228, %p229
      %p231 = scmp.ne.s32.totalorder %s223, %s225
      %p232 = scmp.eq.s32.totalorder %s26, 7
      %p233 = por %p231, %p232
      %p234 = scmp.ne.s32.totalorder %s225, %s226
      %p235 = scmp.eq.s32.totalorder %s26, 0
      %p236 = por %p234, %p235
      %p237 = scmp.ne.s32.totalorder %s225, %s226
      %p238 = scmp.eq.s32.totalorder %s27, 7
      %p239 = por %p237, %p238
      %p241 = scmp.ne.s32.totalorder %s226, %s240
      %p242 = scmp.eq.s32.totalorder %s27, 0
      %p243 = por %p241, %p242
      %p244 = scmp.le.s32.totalorder 1, %s21
      %p245 = scmp.lt.s32.totalorder %s21, 9
      %p246 = pnand %p244, %p245
      %p247 = pneg %p246
      // Predicated region
      $region9: #{tpu_custom_call.1} parent=5 // pred_check
        _
      $region10: #{tpu_custom_call.1} parent=5 // pred_check_branch
        %249 = sbr.rel (%p246) target = $region12
      $region11: #{tpu_custom_call.1} parent=5 // pred_region
        %s250 = ssub.s32 %s21, 1
        // Predicated region
        $region13: #{tpu_custom_call.1} parent=11 // pred_check
          %p251 = pneg %p68
        $region14: #{tpu_custom_call.1} parent=11 // pred_check_branch
          %253 = sbr.rel (%p251) target = $region16
        $region15: #{tpu_custom_call.1} parent=11 // pred_region
          %s255 = ssub.s32 32, 32
          %256 = vsyncadd [#allocation7], %s255
          %s258 = sshll.u32 [#allocation6], 4
          %s259 = int_to_ptr.vmem [resolvable:$true] %s258
          %261 = dma.hbm_to_vmem [thread:$0]  %s1, 32, %s259, [#allocation7]
        $region16: #{tpu_custom_call.1} parent=11 // pred_fallthru
          _
        // Predicated region
        $region17: #{tpu_custom_call.1} parent=11 // pred_check
          %p262 = pneg %p89
        $region18: #{tpu_custom_call.1} parent=11 // pred_check_branch
          %264 = sbr.rel (%p262) target = $region20
        $region19: #{tpu_custom_call.1} parent=11 // pred_region
          _
        $region20: #{tpu_custom_call.1} parent=11 // pred_fallthru
          _
        // Predicated region
        $region21: #{tpu_custom_call.1} parent=11 // pred_check
          %p265 = pneg %p110
        $region22: #{tpu_custom_call.1} parent=11 // pred_check_branch
          %267 = sbr.rel (%p265) target = $region24
        $region23: #{tpu_custom_call.1} parent=11 // pred_region
          %s269 = ssub.s32 16, 16
          %270 = vsyncadd [#allocation7], %s269
          %s272 = sshll.u32 [#allocation8], 4
          %s273 = int_to_ptr.vmem [resolvable:$true] %s272
          %275 = dma.hbm_to_vmem [thread:$0]  %s3, 16, %s273, [#allocation7]
        $region24: #{tpu_custom_call.1} parent=11 // pred_fallthru
          _
        // Predicated region
        $region25: #{tpu_custom_call.1} parent=11 // pred_check
          %p276 = pneg %p131
        $region26: #{tpu_custom_call.1} parent=11 // pred_check_branch
          %278 = sbr.rel (%p276) target = $region28
        $region27: #{tpu_custom_call.1} parent=11 // pred_region
          _
        $region28: #{tpu_custom_call.1} parent=11 // pred_fallthru
          _
        // Predicated region
        $region29: #{tpu_custom_call.1} parent=11 // pred_check
          %p279 = pneg %p152
        $region30: #{tpu_custom_call.1} parent=11 // pred_check_branch
          %281 = sbr.rel (%p279) target = $region32
        $region31: #{tpu_custom_call.1} parent=11 // pred_region
          %s283 = ssub.s32 16, 16
          %284 = vsyncadd [#allocation10], %s283
          %s286 = sshll.u32 [#allocation9], 4
          %s287 = int_to_ptr.vmem [resolvable:$true] %s286
          %289 = dma.hbm_to_vmem [thread:$0]  %s5, 16, %s287, [#allocation10]
        $region32: #{tpu_custom_call.1} parent=11 // pred_fallthru
          _
        // Predicated region
        $region33: #{tpu_custom_call.1} parent=11 // pred_check
          %p290 = pneg %p173
        $region34: #{tpu_custom_call.1} parent=11 // pred_check_branch
          %292 = sbr.rel (%p290) target = $region36
        $region35: #{tpu_custom_call.1} parent=11 // pred_region
          _
        $region36: #{tpu_custom_call.1} parent=11 // pred_fallthru
          _
        // Predicated region
        $region37: #{tpu_custom_call.1} parent=11 // pred_check
          %p293 = pneg %p194
        $region38: #{tpu_custom_call.1} parent=11 // pred_check_branch
          %295 = sbr.rel (%p293) target = $region40
        $region39: #{tpu_custom_call.1} parent=11 // pred_region
          _
        $region40: #{tpu_custom_call.1} parent=11 // pred_fallthru
          _
        // Predicated region
        $region41: #{tpu_custom_call.1} parent=11 // pred_check
          %p296 = pneg %p215
        $region42: #{tpu_custom_call.1} parent=11 // pred_check_branch
          %298 = sbr.rel (%p296) target = $region44
        $region43: #{tpu_custom_call.1} parent=11 // pred_region
          _
        $region44: #{tpu_custom_call.1} parent=11 // pred_fallthru
          _
      $region12: #{tpu_custom_call.1} parent=5 // pred_fallthru
        _
      %p299 = scmp.lt.s32.totalorder %s21, 8
      // Predicated region
      $region45: #{tpu_custom_call.1} parent=5 // pred_check
        %p300 = pneg %p299
      $region46: #{tpu_custom_call.1} parent=5 // pred_check_branch
        %302 = sbr.rel (%p300) target = $region48
      $region47: #{tpu_custom_call.1} parent=5 // pred_region
        // Predicated region
        $region49: #{tpu_custom_call.1} parent=47 // pred_check
          %p303 = pneg %p41
        $region50: #{tpu_custom_call.1} parent=47 // pred_check_branch
          %305 = sbr.rel (%p303) target = $region52
        $region51: #{tpu_custom_call.1} parent=47 // pred_region
          %s306 = sand.u32 %s31, 1
          %s307 = scalar_lea.sflag [#allocation4], %s306
          %s308 = sand.u32 %s31, 1
          %s309 = smul.addr %s308, 2
          %s310 = scalar_lea.vmem [#allocation3], %s309
          %s312 = ssub.s32 32, 32
          %313 = vsyncadd %s307, %s312
          %s314 = smul.addr %s21, 32
          %s315 = scalar_lea.hbm %s0, %s314
          %s317 = sshll.u32 %s310, 4
          %s318 = int_to_ptr.vmem [resolvable:$true] %s317
          %320 = dma.hbm_to_vmem [thread:$0]  %s315, 32, %s318, %s307
        $region52: #{tpu_custom_call.1} parent=47 // pred_fallthru
          _
      $region48: #{tpu_custom_call.1} parent=5 // pred_fallthru
        _
      %p321 = scmp.le.s32.totalorder 1, %s21
      %p322 = scmp.lt.s32.totalorder %s21, 9
      %p323 = pnand %p321, %p322
      %p324 = pneg %p323
      // Predicated region
      $region53: #{tpu_custom_call.1} parent=5 // pred_check
        _
      $region54: #{tpu_custom_call.1} parent=5 // pred_check_branch
        %326 = sbr.rel (%p323) target = $region56
      $region55: #{tpu_custom_call.1} parent=5 // pred_region
        %s327 = ssub.s32 %s21, 1
        %s328 = sand.u32 %s34, 1
        %s329 = scalar_lea.sflag [#allocation4], %s328
        %s330 = sand.u32 %s34, 1
        %s331 = smul.addr %s330, 2
        %s332 = scalar_lea.vmem [#allocation3], %s331
        // Predicated region
        $region57: #{tpu_custom_call.1} parent=55 // pred_check
          %p333 = pneg %p47
        $region58: #{tpu_custom_call.1} parent=55 // pred_check_branch
          %335 = sbr.rel (%p333) target = $region60
        $region59: #{tpu_custom_call.1} parent=55 // pred_region
          %336 = dma.done %s329, 32
        $region60: #{tpu_custom_call.1} parent=55 // pred_fallthru
          _
        // Predicated region
        $region61: #{tpu_custom_call.1} parent=55 // pred_check
          %p337 = pneg %p68
        $region62: #{tpu_custom_call.1} parent=55 // pred_check_branch
          %339 = sbr.rel (%p337) target = $region64
        $region63: #{tpu_custom_call.1} parent=55 // pred_region
          %340 = dma.done [#allocation7], 32
        $region64: #{tpu_custom_call.1} parent=55 // pred_fallthru
          _
        // Predicated region
        $region65: #{tpu_custom_call.1} parent=55 // pred_check
          %p341 = pneg %p110
        $region66: #{tpu_custom_call.1} parent=55 // pred_check_branch
          %343 = sbr.rel (%p341) target = $region68
        $region67: #{tpu_custom_call.1} parent=55 // pred_region
          %344 = dma.done [#allocation7], 16
        $region68: #{tpu_custom_call.1} parent=55 // pred_fallthru
          _
        // Predicated region
        $region69: #{tpu_custom_call.1} parent=55 // pred_check
          %p345 = pneg %p152
        $region70: #{tpu_custom_call.1} parent=55 // pred_check_branch
          %347 = sbr.rel (%p345) target = $region72
        $region71: #{tpu_custom_call.1} parent=55 // pred_region
          %348 = dma.done [#allocation10], 16
        $region72: #{tpu_custom_call.1} parent=55 // pred_fallthru
          _
        %s349 = sand.u32 %s34, 1
        %s350 = scalar_lea.sflag [#allocation4], %s349
        %s351 = sand.u32 %s34, 1
        %s352 = smul.addr %s351, 2
        %s353 = scalar_lea.vmem [#allocation3], %s352
        %p354 = pneg %p47
        %p355 = pneg %p44
        %p356 = pneg %p68
        %p357 = pneg %p65
        %p358 = pneg %p89
        %p359 = pneg %p86
        %p360 = pneg %p110
        %p361 = pneg %p107
        %p362 = pneg %p131
        %p363 = pneg %p128
        %p364 = pneg %p152
        %p365 = pneg %p149
        %p366 = pneg %p173
        %p367 = pneg %p170
        %p368 = pneg %p194
        %p369 = pneg %p191
        %p370 = pneg %p215
        %p371 = pneg %p212
        %p372 = pneg %p236
        %p373 = pneg %p233
        %p375 = scmp.eq.s32.totalorder %s26, 0
        // Predicated region
        $region73: #{tpu_custom_call.1} parent=55 // pred_check
          %p376 = pneg %p375
        $region74: #{tpu_custom_call.1} parent=55 // pred_check_branch
          %378 = sbr.rel (%p376) target = $region76
        $region75: #{tpu_custom_call.1} parent=55 // pred_region
          %v379 = vld [vmem:[#allocation6] sm:$0x3]
          %vm380 = vcmask 254976
          %381 = vst.msk [vmem:[#allocation2] sm:$0x3] %vm380, %v379
        $region76: #{tpu_custom_call.1} parent=55 // pred_fallthru
          _
        %v382 = vld [vmem:[%s332] sm:$0x3]
        %v383 = vld [vmem:[#allocation2] sm:$0x3]
        %385 = vrot.lane.b32.xlu0 %v383, 16
        %v386 = vpop.permute.xlu0 %385
        %vm388 = vcmask 130048
        %v389 = vsel %vm388, %v382, %v386
        %v390 = vpack.c.bf16 %v389, %v389
        %v391 = vld [vmem:[%s2] sm:$0xf]
        %v392 = vld [vmem:[%s2 + $0x4] sm:$0xf]
        %v393 = vld [vmem:[%s2 + $0x8] sm:$0xf]
        %v394 = vld [vmem:[%s2 + $0xc] sm:$0xf]
        %v395 = vld [vmem:[%s2 + $0x10] sm:$0xf]
        %v396 = vld [vmem:[%s2 + $0x14] sm:$0xf]
        %v397 = vld [vmem:[#allocation8] sm:$0x1]
        %v399 = vlaneseq
        %v400 = vshrl.u32 %v399, 7
        %v401 = vsub.s32 0, %v400
        %v402 = vrot.slane %v397, %v401
        %v410 = vunpack.c.l.b16 %v391
        %v411 = vunpack.c.l.b16 %v392
        %v412 = vunpack.c.l.b16 %v393
        %v413 = vunpack.c.l.b16 %v394
        %v414 = vunpack.c.l.b16 %v395
        %v415 = vunpack.c.l.b16 %v396
        %v416 = vpack.c.b16 %v411, %v410
        %v417 = vpack.c.b16 %v413, %v412
        %v418 = vpack.c.b16 %v415, %v414
        %vm422 = vcmask 392192
        %v424 = vsel %vm422, %v390, 0
        %426 = vmatprep.subr.bf16.mxu0 0
        %427 = vmatpush1.bf16.msra.mxu0 %v416
        %428 = vmatprep.subr.bf16.mxu0 0
        %429 = vmatpush1.bf16.msra.mxu0 %v417
        %430 = vmatprep.subr.bf16.mxu0 0
        %431 = vmatpush1.bf16.msra.mxu0 %v418
        %432 = vmatprep.subr.bf16.mxu0 0
        %433 = vmatpush1.bf16.msra.mxu0 0
        %434 = vmatprep.subr.bf16.mxu0 0
        %435 = vmatpush1.bf16.msra.mxu0 0
        %436 = vmatprep.subr.bf16.mxu0 0
        %437 = vmatpush1.bf16.msra.mxu0 0
        %438 = vmatprep.subr.bf16.mxu0 0
        %439 = vmatpush1.bf16.msra.mxu0 0
        %440 = vmatprep.subr.bf16.mxu0 0
        %441 = vmatpush1.bf16.msra.mxu0 0
        %442 = vmatprep.subr.bf16.mxu0 0
        %443 = vmatpush1.bf16.msra.mxu0 0
        %444 = vmatprep.subr.bf16.mxu0 0
        %445 = vmatpush1.bf16.msra.mxu0 0
        %446 = vmatprep.subr.bf16.mxu0 0
        %447 = vmatpush1.bf16.msra.mxu0 0
        %448 = vmatprep.subr.bf16.mxu0 0
        %449 = vmatpush1.bf16.msra.mxu0 0
        %450 = vmatprep.subr.bf16.mxu0 0
        %451 = vmatpush1.bf16.msra.mxu0 0
        %452 = vmatprep.subr.bf16.mxu0 0
        %453 = vmatpush1.bf16.msra.mxu0 0
        %454 = vmatprep.subr.bf16.mxu0 0
        %455 = vmatpush1.bf16.msra.mxu0 0
        %456 = vmatprep.subr.bf16.mxu0 0
        %457 = vmatpush1.bf16.msra.mxu0 0
        %458 = vmatprep.mubr.bf16.mxu0 0
        %459 = vmatmul.mubr.bf16.gmra.mrb[0].mxu0 %v424
        %v460 = vpop.f32.mrb[0].mxu0
        %v461 = vadd.f32 %v402, %v460
        %v462 = vpop.f32.mrb[0].mxu0
        %v463 = vpop.f32.mrb[0].mxu0
        %v464 = vpop.f32.mrb[0].mxu0
        %465 = vdwg.mxu0
        %v466 = vtanh.pop %v461
        %v467 = vpack.c.bf16 %v382, %v382
        %v468 = vld [vmem:[%s4] sm:$0xf]
        %v469 = vld [vmem:[%s4 + $0x4] sm:$0xf]
        %v470 = vld [vmem:[#allocation9] sm:$0x1]
        %v472 = vlaneseq
        %v473 = vshrl.u32 %v472, 7
        %v474 = vsub.s32 0, %v473
        %v475 = vrot.slane %v470, %v474
        %v479 = vunpack.c.l.b16 %v468
        %v480 = vunpack.c.l.b16 %v469
        %v481 = vpack.c.b16 %v480, %v479
        %v484 = vsel %vm388, %v467, 0
        %486 = vmatprep.subr.bf16.mxu0 0
        %487 = vmatpush1.bf16.msra.mxu0 %v481
        %488 = vmatprep.subr.bf16.mxu0 0
        %489 = vmatpush1.bf16.msra.mxu0 0
        %490 = vmatprep.subr.bf16.mxu0 0
        %491 = vmatpush1.bf16.msra.mxu0 0
        %492 = vmatprep.subr.bf16.mxu0 0
        %493 = vmatpush1.bf16.msra.mxu0 0
        %494 = vmatprep.subr.bf16.mxu0 0
        %495 = vmatpush1.bf16.msra.mxu0 0
        %496 = vmatprep.subr.bf16.mxu0 0
        %497 = vmatpush1.bf16.msra.mxu0 0
        %498 = vmatprep.subr.bf16.mxu0 0
        %499 = vmatpush1.bf16.msra.mxu0 0
        %500 = vmatprep.subr.bf16.mxu0 0
        %501 = vmatpush1.bf16.msra.mxu0 0
        %502 = vmatprep.subr.bf16.mxu0 0
        %503 = vmatpush1.bf16.msra.mxu0 0
        %504 = vmatprep.subr.bf16.mxu0 0
        %505 = vmatpush1.bf16.msra.mxu0 0
        %506 = vmatprep.subr.bf16.mxu0 0
        %507 = vmatpush1.bf16.msra.mxu0 0
        %508 = vmatprep.subr.bf16.mxu0 0
        %509 = vmatpush1.bf16.msra.mxu0 0
        %510 = vmatprep.subr.bf16.mxu0 0
        %511 = vmatpush1.bf16.msra.mxu0 0
        %512 = vmatprep.subr.bf16.mxu0 0
        %513 = vmatpush1.bf16.msra.mxu0 0
        %514 = vmatprep.subr.bf16.mxu0 0
        %515 = vmatpush1.bf16.msra.mxu0 0
        %516 = vmatprep.subr.bf16.mxu0 0
        %517 = vmatpush1.bf16.msra.mxu0 0
        %518 = vmatprep.mubr.bf16.mxu0 0
        %519 = vmatmul.mubr.bf16.gmra.mrb[0].mxu0 %v484
        %v520 = vpop.f32.mrb[0].mxu0
        %v521 = vadd.f32 %v475, %v520
        %v522 = vpop.f32.mrb[0].mxu0
        %v523 = vpop.f32.mrb[0].mxu0
        %v524 = vpop.f32.mrb[0].mxu0
        %525 = vdwg.mxu0
        %v526 = vmax.f32 %v521, 0.0
        %v527 = vpack.c.bf16 %v526, %v526
        %v528 = vld [vmem:[%s6] sm:$0xf]
        %v529 = vld [vmem:[%s6 + $0x4] sm:$0xf]
        %v530 = vld [vmem:[%s6 + $0x8] sm:$0xf]
        %v531 = vld [vmem:[%s6 + $0xc] sm:$0xf]
        %v532 = vld [vmem:[%s7] sm:$0x1]
        %v534 = vlaneseq
        %v535 = vshrl.u32 %v534, 7
        %v536 = vsub.s32 0, %v535
        %v537 = vrot.slane %v532, %v536
        %v543 = vunpack.c.l.b16 %v528
        %v544 = vunpack.c.l.b16 %v529
        %v545 = vunpack.c.l.b16 %v530
        %v546 = vunpack.c.l.b16 %v531
        %v547 = vpack.c.b16 %v544, %v543
        %v548 = vpack.c.b16 %v546, %v545
        %vm551 = vcmask 261120
        %v553 = vsel %vm551, %v527, 0
        %555 = vmatprep.subr.bf16.mxu0 0
        %556 = vmatpush1.bf16.msra.mxu0 %v547
        %557 = vmatprep.subr.bf16.mxu0 0
        %558 = vmatpush1.bf16.msra.mxu0 %v548
        %559 = vmatprep.subr.bf16.mxu0 0
        %560 = vmatpush1.bf16.msra.mxu0 0
        %561 = vmatprep.subr.bf16.mxu0 0
        %562 = vmatpush1.bf16.msra.mxu0 0
        %563 = vmatprep.subr.bf16.mxu0 0
        %564 = vmatpush1.bf16.msra.mxu0 0
        %565 = vmatprep.subr.bf16.mxu0 0
        %566 = vmatpush1.bf16.msra.mxu0 0
        %567 = vmatprep.subr.bf16.mxu0 0
        %568 = vmatpush1.bf16.msra.mxu0 0
        %569 = vmatprep.subr.bf16.mxu0 0
        %570 = vmatpush1.bf16.msra.mxu0 0
        %571 = vmatprep.subr.bf16.mxu0 0
        %572 = vmatpush1.bf16.msra.mxu0 0
        %573 = vmatprep.subr.bf16.mxu0 0
        %574 = vmatpush1.bf16.msra.mxu0 0
        %575 = vmatprep.subr.bf16.mxu0 0
        %576 = vmatpush1.bf16.msra.mxu0 0
        %577 = vmatprep.subr.bf16.mxu0 0
        %578 = vmatpush1.bf16.msra.mxu0 0
        %579 = vmatprep.subr.bf16.mxu0 0
        %580 = vmatpush1.bf16.msra.mxu0 0
        %581 = vmatprep.subr.bf16.mxu0 0
        %582 = vmatpush1.bf16.msra.mxu0 0
        %583 = vmatprep.subr.bf16.mxu0 0
        %584 = vmatpush1.bf16.msra.mxu0 0
        %585 = vmatprep.subr.bf16.mxu0 0
        %586 = vmatpush1.bf16.msra.mxu0 0
        %587 = vmatprep.mubr.bf16.mxu0 0
        %588 = vmatmul.mubr.bf16.gmra.mrb[0].mxu0 %v553
        %v589 = vpop.f32.mrb[0].mxu0
        %v590 = vadd.f32 %v537, %v589
        %v591 = vpop.f32.mrb[0].mxu0
        %v592 = vpop.f32.mrb[0].mxu0
        %v593 = vpop.f32.mrb[0].mxu0
        %594 = vdwg.mxu0
        %vm595 = vcmask 25600
        %v596 = vsel %vm595, %v590, -inf
        %v597 = vrot.slane %v596, 4
        %v598 = vmax.f32 %v596, %v597
        %v599 = vrot.slane %v598, 2
        %v600 = vmax.f32 %v598, %v599
        %v601 = vrot.slane %v600, 1
        %v602 = vmax.f32 %v600, %v601
        %v603 = vsub.f32 %v590, %v602
        %v604 = vmul.f32 %v603, 1.442695
        %v605 = vpow.pop %v604
        %v606 = vsel %vm595, %v605, 0.0
        %v607 = vrot.slane %v606, 4
        %v608 = vadd.f32 %v606, %v607
        %v609 = vrot.slane %v608, 2
        %v610 = vadd.f32 %v608, %v609
        %v611 = vrot.slane %v610, 1
        %v612 = vadd.f32 %v610, %v611
        %v613 = vrcp.pop %v612
        %v614 = vmul.f32 %v605, %v613
        %v615 = vld [vmem:[%s8] sm:$0xf]
        %vm616 = vcmask 31744
        %v618 = vsel %vm616, %v614, 0
        %vm620 = vcmask 1043456
        %v622 = vsel %vm620, %v615, 0
        %624 = vmatprep.subr.mxu0 0.0
        %625 = vmatpush1.msra.mxu0 %v622
        %626 = vmatprep.subr.mxu0 0.0
        %627 = vmatpush1.msra.mxu0 0.0
        %628 = vmatprep.subr.mxu0 0.0
        %629 = vmatpush1.msra.mxu0 0.0
        %630 = vmatprep.subr.mxu0 0.0
        %631 = vmatpush1.msra.mxu0 0.0
        %632 = vmatprep.subr.mxu0 0.0
        %633 = vmatpush1.msra.mxu0 0.0
        %634 = vmatprep.subr.mxu0 0.0
        %635 = vmatpush1.msra.mxu0 0.0
        %636 = vmatprep.subr.mxu0 0.0
        %637 = vmatpush1.msra.mxu0 0.0
        %638 = vmatprep.subr.mxu0 0.0
        %639 = vmatpush1.msra.mxu0 0.0
        %640 = vmatprep.subr.mxu0 0.0
        %641 = vmatpush1.msra.mxu0 0.0
        %642 = vmatprep.subr.mxu0 0.0
        %643 = vmatpush1.msra.mxu0 0.0
        %644 = vmatprep.subr.mxu0 0.0
        %645 = vmatpush1.msra.mxu0 0.0
        %646 = vmatprep.subr.mxu0 0.0
        %647 = vmatpush1.msra.mxu0 0.0
        %648 = vmatprep.subr.mxu0 0.0
        %649 = vmatpush1.msra.mxu0 0.0
        %650 = vmatprep.subr.mxu0 0.0
        %651 = vmatpush1.msra.mxu0 0.0
        %652 = vmatprep.subr.mxu0 0.0
        %653 = vmatpush1.msra.mxu0 0.0
        %654 = vmatprep.subr.mxu0 0.0
        %655 = vmatpush1.msra.mxu0 0.0
        %656 = vmatprep.subr.mxu0 0.0
        %657 = vmatpush1.msra.mxu0 0.0
        %658 = vmatprep.subr.mxu0 0.0
        %659 = vmatpush1.msra.mxu0 0.0
        %660 = vmatprep.subr.mxu0 0.0
        %661 = vmatpush1.msra.mxu0 0.0
        %662 = vmatprep.subr.mxu0 0.0
        %663 = vmatpush1.msra.mxu0 0.0
        %664 = vmatprep.subr.mxu0 0.0
        %665 = vmatpush1.msra.mxu0 0.0
        %666 = vmatprep.subr.mxu0 0.0
        %667 = vmatpush1.msra.mxu0 0.0
        %668 = vmatprep.subr.mxu0 0.0
        %669 = vmatpush1.msra.mxu0 0.0
        %670 = vmatprep.subr.mxu0 0.0
        %671 = vmatpush1.msra.mxu0 0.0
        %672 = vmatprep.subr.mxu0 0.0
        %673 = vmatpush1.msra.mxu0 0.0
        %674 = vmatprep.subr.mxu0 0.0
        %675 = vmatpush1.msra.mxu0 0.0
        %676 = vmatprep.subr.mxu0 0.0
        %677 = vmatpush1.msra.mxu0 0.0
        %678 = vmatprep.subr.mxu0 0.0
        %679 = vmatpush1.msra.mxu0 0.0
        %680 = vmatprep.subr.mxu0 0.0
        %681 = vmatpush1.msra.mxu0 0.0
        %682 = vmatprep.subr.mxu0 0.0
        %683 = vmatpush1.msra.mxu0 0.0
        %684 = vmatprep.subr.mxu0 0.0
        %685 = vmatpush1.msra.mxu0 0.0
        %686 = vmatprep.subr.mxu0 0.0
        %687 = vmatpush1.msra.mxu0 0.0
        %688 = vmatprep.mubr.f32.mxu0 0.0
        %689 = vmatmul.mubr.f32.gmra.mrb[0].mxu0 %v618
        %v690 = vpop.f32.mrb[0].mxu0
        %v691 = vadd.f32 0.0, %v690
        %v692 = vpop.f32.mrb[0].mxu0
        %693 = vdwg.mxu0
        %v694 = vmul.f32 %v466, %v691
        %696 = vrot.lane.b32.xlu0 %v694, 96
        %v697 = vpop.permute.xlu0 %696
        %v699 = vadd.f32 %v694, %v697
        %700 = vrot.lane.b32.xlu0 %v694, 64
        %v701 = vpop.permute.xlu0 %700
        %v703 = vadd.f32 %v699, %v701
        %704 = vrot.lane.b32.xlu0 %v694, 32
        %v705 = vpop.permute.xlu0 %704
        %v707 = vadd.f32 %v703, %v705
        %vm708 = vcmask 254976
        %709 = vst.msk [vmem:[#allocation2] sm:$0x3] %vm708, %v707
        %s710 = smul.u32 %s26, 2
        %s711 = scalar_lea.vmem [#allocation11], %s710
        %712 = vst.msk [vmem:[%s711] sm:$0x3] %vm708, %v707
        // Predicated region
        $region77: #{tpu_custom_call.1} parent=55 // pred_check
          %p713 = pneg %p233
        $region78: #{tpu_custom_call.1} parent=55 // pred_check_branch
          %715 = sbr.rel (%p713) target = $region80
        $region79: #{tpu_custom_call.1} parent=55 // pred_region
          %s717 = ssub.s32 256, 256
          %718 = vsyncadd [#allocation5], %s717
          %s719 = sshll.u32 [#allocation11], 4
          %s720 = int_to_ptr.vmem [resolvable:$true] %s719
          %725 = dma.vmem_to_hbm [thread:$0]  %s720, 256, %s9, [#allocation5], 32, 32, 2
        $region80: #{tpu_custom_call.1} parent=55 // pred_fallthru
          _
        // Predicated region
        $region81: #{tpu_custom_call.1} parent=55 // pred_check
          %p726 = pneg %p233
        $region82: #{tpu_custom_call.1} parent=55 // pred_check_branch
          %728 = sbr.rel (%p726) target = $region84
        $region83: #{tpu_custom_call.1} parent=55 // pred_region
          %729 = dma.done [#allocation5], 256
        $region84: #{tpu_custom_call.1} parent=55 // pred_fallthru
          _
      $region56: #{tpu_custom_call.1} parent=5 // pred_fallthru
        _
      %p730 = scmp.le.s32.totalorder 2, %s21
      // Predicated region
      $region85: #{tpu_custom_call.1} parent=5 // pred_check
        %p731 = pneg %p730
      $region86: #{tpu_custom_call.1} parent=5 // pred_check_branch
        %733 = sbr.rel (%p731) target = $region88
      $region87: #{tpu_custom_call.1} parent=5 // pred_region
        %s734 = ssub.s32 %s21, 2
      $region88: #{tpu_custom_call.1} parent=5 // pred_fallthru
        _
    $region6: #{tpu_custom_call.1} parent=1 // loop_footer
      %s25 = sadd.s32 1, %s21
    $region7: #{tpu_custom_call.1} parent=1 // loop_footer_branch
      %20 = sbr.rel target = $region3
    $region8: #{tpu_custom_call.1} parent=1 // loop_exit
      _
    %735 = vsyncpa [#allocation4], 1
    %s736 = scalar_lea.sflag [#allocation4], 1
    %737 = vsyncpa %s736, 1
    %738 = vsyncpa [#allocation7], 1
    %739 = vsyncpa [#allocation10], 1
    %740 = vsyncpa [#allocation5], 1
    %s741 = scalar_lea.sflag [#allocation5], 1
    %742 = vsyncpa %s741, 1

</llo_original>
